<compile_context>
chip_gen: v7x
topology: tpu7x:2x2x1
jax: 0.10.0
libtpu: 0.0.40
codegen_flags: <defaults>
</compile_context>

<pallas_src>
import math

import jax
import jax.numpy as jnp
from jax import lax
from jax.experimental import pallas as pl
from jax.experimental.pallas import tpu as pltpu


# ---------------------------------------------------------------------------
# Kernels
# ---------------------------------------------------------------------------

def _diffs_kernel(test_ref, train_ref, out_ref):
    # test_ref:  (tm, D)     tile of test points
    # train_ref: (tn, D)     tile of train points
    # out_ref:   (tm, tn, D)
    t = test_ref[...]
    tr = train_ref[...]
    out_ref[...] = (t[:, None, :] - tr[None, :, :]).astype(out_ref.dtype)


def _sqdist_kernel(test_ref, train_ref, tsq_ref, rsq_ref, out_ref):
    # ||t_i - r_j||^2 = ||t_i||^2 + ||r_j||^2 - 2 t_i . r_j   (cross term on MXU)
    cross = lax.dot_general(
        test_ref[...], train_ref[...],
        dimension_numbers=(((1,), (1,)), ((), ())),
        preferred_element_type=jnp.float32)                 # (tm, tn)
    out_ref[...] = (tsq_ref[...] + rsq_ref[...] - 2.0 * cross).astype(out_ref.dtype)


# ---------------------------------------------------------------------------
# Wrappers
# ---------------------------------------------------------------------------

def _round_up(x, m):
    return ((x + m - 1) // m) * m


def _derived_vmem_limit():
    """Per-generation scoped-VMEM limit with headroom (v7x has only 64 MiB)."""
    try:
        cap = getattr(pltpu.get_tpu_info(), "vmem_capacity_bytes", None)
        if cap:
            return int(cap * 3 // 4)
    except Exception:
        pass
    return 48 * 1024 * 1024


def pallas_diffs(test_Xs, train_Xs, *, tm=128, tn=128, out_dtype=None,
                 vmem_limit_bytes=None):
    """Computes test_Xs[:, None] - train_Xs[None, :] (Kernel._diffs)."""
    n_test = test_Xs.shape[0]
    n_train = train_Xs.shape[0]
    feat_shape = test_Xs.shape[1:]
    assert feat_shape == train_Xs.shape[1:], "feature dims must match"

    d = math.prod(feat_shape) if feat_shape else 1
    out_dtype = test_Xs.dtype if out_dtype is None else out_dtype

    if vmem_limit_bytes is None:
        vmem_limit_bytes = _derived_vmem_limit()

    # Tile sizes: multiples of 8 (sublanes), clamped to the problem size.
    tm = max(8, min(tm, _round_up(n_test, 8)))
    tn = max(8, min(tn, _round_up(n_train, 8)))

    in_isz = jnp.dtype(test_Xs.dtype).itemsize
    out_isz = jnp.dtype(out_dtype).itemsize

    def _vmem_bytes(tm_, tn_):
        # double-buffered output block + double-buffered input blocks
        return 2 * (out_isz * tm_ * tn_ * d + in_isz * (tm_ + tn_) * d)

    def _halve(t):
        return max(8, ((t // 2) // 8) * 8)

    budget = max(vmem_limit_bytes - 8 * 1024 * 1024, vmem_limit_bytes // 2)
    while _vmem_bytes(tm, tn) > budget and tm > 8:
        tm = _halve(tm)
    while _vmem_bytes(tm, tn) > budget and tn > 8:
        tn = _halve(tn)

    test_flat = test_Xs.reshape(n_test, d)
    train_flat = train_Xs.reshape(n_train, d)

    grid = (pl.cdiv(n_test, tm), pl.cdiv(n_train, tn))

    out = pl.pallas_call(
        _diffs_kernel,
        out_shape=jax.ShapeDtypeStruct((n_test, n_train, d), out_dtype),
        grid_spec=pl.GridSpec(
            grid=grid,
            in_specs=[
                pl.BlockSpec((tm, d), lambda i, j: (i, 0)),
                pl.BlockSpec((tn, d), lambda i, j: (j, 0)),
            ],
            out_specs=pl.BlockSpec((tm, tn, d), lambda i, j: (i, j, 0)),
        ),
        compiler_params=pltpu.CompilerParams(
            dimension_semantics=("parallel", "parallel"),
            vmem_limit_bytes=int(vmem_limit_bytes),
        ),
    )(test_flat, train_flat)

    # Metadata-only reshape (splits the trailing dim) — no extra HBM traffic.
    return out.reshape(n_test, n_train, *feat_shape)


def pallas_sq_dists(test_Xs, train_Xs, *, tm=256, tn=None):
    """Fused ||test_i - train_j||^2 summed over all feature dims -> (N_test, N_train)."""
    n_test = test_Xs.shape[0]
    n_train = train_Xs.shape[0]
    feat_shape = test_Xs.shape[1:]
    assert feat_shape == train_Xs.shape[1:], "feature dims must match"
    d = math.prod(feat_shape) if feat_shape else 1

    test_flat = test_Xs.reshape(n_test, d).astype(jnp.float32)
    train_flat = train_Xs.reshape(n_train, d).astype(jnp.float32)
    # Squared norms precomputed (O(N*d), negligible) so the kernel needs no
    # in-kernel transposes.
    tsq = jnp.sum(test_flat * test_flat, axis=-1, keepdims=True)       # (n_test, 1)
    rsq = jnp.sum(train_flat * train_flat, axis=-1, keepdims=True).T   # (1, n_train)

    tm = max(8, min(tm, _round_up(n_test, 8)))
    if tn is None:
        # Lane dim of the output block: either a multiple of 128 or full n_train.
        tn = n_train if n_train < 128 else 128 * min(4, n_train // 128)

    grid = (pl.cdiv(n_test, tm), pl.cdiv(n_train, tn))

    return pl.pallas_call(
        _sqdist_kernel,
        out_shape=jax.ShapeDtypeStruct((n_test, n_train), jnp.float32),
        grid_spec=pl.GridSpec(
            grid=grid,
            in_specs=[
                pl.BlockSpec((tm, d), lambda i, j: (i, 0)),
                pl.BlockSpec((tn, d), lambda i, j: (j, 0)),
                pl.BlockSpec((tm, 1), lambda i, j: (i, 0)),
                pl.BlockSpec((1, tn), lambda i, j: (0, j)),
            ],
            out_specs=pl.BlockSpec((tm, tn), lambda i, j: (i, j)),
        ),
        compiler_params=pltpu.CompilerParams(
            dimension_semantics=("parallel", "parallel"),
        ),
    )(test_flat, train_flat, tsq, rsq)


# ---------------------------------------------------------------------------
# Module port
# ---------------------------------------------------------------------------

class KernelJax:
    """JAX/Pallas port of WILDS QRM.Kernel (base class)."""

    def __init__(self, bw=None):
        self.bw = 0.05 if bw is None else bw

    def _diffs(self, test_Xs, train_Xs):
        """Difference between each x in test_Xs and all train_Xs."""
        return pallas_diffs(test_Xs, train_Xs)

    def _sq_dists(self, test_Xs, train_Xs):
        """Fused squared distances (extra helper for derived KDE kernels).

        Avoids materializing the rank-3 diffs tensor (D-fold fewer HBM writes).
        """
        return pallas_sq_dists(test_Xs, train_Xs)

    def forward(self, test_Xs, train_Xs):
        """Abstract in the reference module (returns None)."""
        # TODO(synk): forward() is an abstract stub in the PyTorch base class; no compute to port.
        return None

    def sample(self, train_Xs):
        """Abstract in the reference module (returns None)."""
        # TODO(synk): sample() is an abstract stub in the PyTorch base class; no compute to port.
        return None


if __name__ == "__main__":
    key = jax.random.PRNGKey(0)
    k1, k2, k3, k4, k5, k6 = jax.random.split(key, 6)

    kernel = KernelJax(bw=0.05)

    # Case 1: demo shapes — 8 test, 16 train, feature shape (4, 4, 8) -> D=128.
    test1 = jax.random.normal(k1, (8, 4, 4, 8), dtype=jnp.float32)
    train1 = jax.random.normal(k2, (16, 4, 4, 8), dtype=jnp.float32)
    d1 = jax.block_until_ready(kernel._diffs(test1, train1))
    r1 = test1[:, None] - train1[None, :]
    assert d1.shape == (8, 16, 4, 4, 8), d1.shape
    assert jnp.allclose(d1, r1, atol=1e-6), "mismatch vs reference (case 1)"

    # Case 2: tile-ragged sizes (72, 200) — exercises cdiv grid with no
    # wrapper-side padding and no post-kernel slice.
    test2 = jax.random.normal(k3, (72, 4, 32), dtype=jnp.float32)    # D=128
    train2 = jax.random.normal(k4, (200, 4, 32), dtype=jnp.float32)
    d2 = jax.block_until_ready(kernel._diffs(test2, train2))
    r2 = test2[:, None] - train2[None, :]
    assert d2.shape == (72, 200, 4, 32), d2.shape
    assert jnp.allclose(d2, r2, atol=1e-6), "mismatch vs reference (case 2)"

    # Case 3: small feature dim (D=16, not a multiple of 128).
    test3 = jax.random.normal(k5, (24, 4, 4), dtype=jnp.float32)
    train3 = jax.random.normal(k6, (40, 4, 4), dtype=jnp.float32)
    d3 = jax.block_until_ready(kernel._diffs(test3, train3))
    r3 = test3[:, None] - train3[None, :]
    assert d3.shape == (24, 40, 4, 4), d3.shape
    assert jnp.allclose(d3, r3, atol=1e-6), "mismatch vs reference (case 3)"

    # Optional bf16 output (halves HBM write bytes for this store-bound kernel).
    d1b = jax.block_until_ready(pallas_diffs(test1, train1, out_dtype=jnp.bfloat16))
    assert d1b.dtype == jnp.bfloat16
    assert jnp.allclose(d1b.astype(jnp.float32), r1, atol=5e-2, rtol=2e-2), \
        "mismatch vs reference (bf16 output)"

    # Fused squared distances (MXU) — rank-3 diffs tensor never materialized.
    sq = jax.block_until_ready(kernel._sq_dists(test2, train2))
    rsq_ref = jnp.sum((test2[:, None] - train2[None, :]) ** 2, axis=(2, 3))
    assert sq.shape == (72, 200), sq.shape
    assert jnp.allclose(sq, rsq_ref, atol=0.5, rtol=1e-2), \
        "mismatch vs reference (fused squared distances)"

    print("KERNEL_OK")
</pallas_src>

<mosaic_0001>
module attributes {stable_mosaic.version = 11 : i64} {
  func.func @_diffs_kernel(%arg0: i32, %arg1: i32, %arg2: memref<8x128xf32, #tpu.memory_space<vmem>>, %arg3: memref<16x128xf32, #tpu.memory_space<vmem>>, %arg4: memref<8x16x128xf32, #tpu.memory_space<vmem>>) attributes {dimension_semantics = [#tpu.dimension_semantics<parallel>, #tpu.dimension_semantics<parallel>], iteration_bounds = array<i64: 1, 1>, scalar_prefetch = 0 : i64, scratch_operands = 0 : i64, tpu.core_type = #tpu.core_type<tc>, window_params = [{transform_indices = @transform_0, window_bounds = array<i64: 8, 128>}, {transform_indices = @transform_1, window_bounds = array<i64: 16, 128>}, {transform_indices = @transform_2, window_bounds = array<i64: 8, 16, 128>}]} {
    %c0 = arith.constant 0 : index
    %c0_0 = arith.constant 0 : index
    %0 = vector.load %arg2[%c0, %c0_0] : memref<8x128xf32, #tpu.memory_space<vmem>>, vector<8x128xf32>
    %c0_1 = arith.constant 0 : index
    %c0_2 = arith.constant 0 : index
    %1 = vector.load %arg3[%c0_1, %c0_2] : memref<16x128xf32, #tpu.memory_space<vmem>>, vector<16x128xf32>
    %2 = vector.shape_cast %0 : vector<8x128xf32> to vector<8x1x128xf32>
    %3 = vector.shape_cast %1 : vector<16x128xf32> to vector<1x16x128xf32>
    %4 = vector.broadcast %2 : vector<8x1x128xf32> to vector<8x16x128xf32>
    %5 = vector.broadcast %3 : vector<1x16x128xf32> to vector<8x16x128xf32>
    %6 = arith.subf %4, %5 : vector<8x16x128xf32>
    %c0_3 = arith.constant 0 : index
    %c0_4 = arith.constant 0 : index
    %c0_5 = arith.constant 0 : index
    %7 = vector.load %arg4[%c0_3, %c0_4, %c0_5] : memref<8x16x128xf32, #tpu.memory_space<vmem>>, vector<8x16x128xf32>
    tpu.vector_store %arg4[%c0_3, %c0_4, %c0_5], %6 {strides = array<i32>} : memref<8x16x128xf32, #tpu.memory_space<vmem>>, vector<8x16x128xf32>,
    return
  }
  func.func @transform_0(%arg0: i32, %arg1: i32) -> (i32, i32) {
    %c0_i32 = arith.constant 0 : i32
    %c0_i32_0 = arith.constant 0 : i32
    return %arg0, %c0_i32 : i32, i32
  }
  func.func @transform_1(%arg0: i32, %arg1: i32) -> (i32, i32) {
    %c0_i32 = arith.constant 0 : i32
    %c0_i32_0 = arith.constant 0 : i32
    return %arg1, %c0_i32 : i32, i32
  }
  func.func @transform_2(%arg0: i32, %arg1: i32) -> (i32, i32, i32) {
    %c0_i32 = arith.constant 0 : i32
    %c0_i32_0 = arith.constant 0 : i32
    return %arg0, %arg1, %c0_i32 : i32, i32, i32
  }
}

</mosaic_0001>

<llo_original>
// kernel: tpu_custom_call.1
$region0: #{tpu_custom_call.1}
  #allocation0 [shape = 'u32[]', space=smem, size = 0x4, offset = 0x4, fixed_abs, tag = 'smem constant byte address 0x4 - core index']
  #allocation1 [shape = 'u32[144,128]{1,0:T(1,128)}', space=vmem, size = 0x12000, scoped, tag = 'internal scratch']
  %s0 = inlined_call_operand.hbm [shape: f32[8,128], index: 0, kind: input, shape index: {}]
  %s1 = inlined_call_operand.hbm [shape: f32[16,128], index: 1, kind: input, shape index: {}]
  %s2 = inlined_call_operand.hbm [shape: f32[8,16,128], index: 2, kind: output, shape index: {}]
  %s3 = sld [smem:[#allocation0]]
  $region26: #{tpu_custom_call.1} parent=0
    _
  %s5 = ssub.s32 1, %s3
  %s6 = scalar_select 0, %s5, %s3
  $region1: #{tpu_custom_call.1} parent=0
    #allocation2 [shape = 'u8[4096]{0}', space=vmem, size = 0x1000, scoped, tag = 'input window, operand 0, single buffered']
    #allocation3 [shape = 's32[1]{0}', space=sflag, size = 0x4, scoped, tag = 'scoped memory for tpu_custom_call.1']
    #allocation4 [shape = 's32[1]{0}', space=sflag, size = 0x4, scoped, tag = 'scoped memory for tpu_custom_call.1']
    #allocation5 [shape = 'u8[8192]{0}', space=vmem, size = 0x2000, scoped, tag = 'input window, operand 1, single buffered']
    #allocation6 [shape = 's32[1]{0}', space=sflag, size = 0x4, scoped, tag = 'scoped memory for tpu_custom_call.1']
    #allocation7 [shape = 'u8[65536]{0}', space=vmem, size = 0x10000, scoped, tag = 'output window, operand 0, single buffered']
    %7 = vsyncpa [#allocation3], 0
    %8 = vsyncpa [#allocation6], 0
    %9 = vsyncpa [#allocation4], 0
    // Predicated region
    $region2: #{tpu_custom_call.1} parent=1 // pred_check
      _
    $region3: #{tpu_custom_call.1} parent=1 // pred_check_branch
      %11 = sbr.rel (0) target = $region5
    $region4: #{tpu_custom_call.1} parent=1 // pred_region
      %s13 = ssub.s32 128, 128
      %14 = vsyncadd [#allocation3], %s13
      %s16 = sshll.u32 [#allocation2], 4
      %s17 = int_to_ptr.vmem [resolvable:$true] %s16
      %19 = dma.hbm_to_vmem [thread:$0]  %s0, 128, %s17, [#allocation3]
    $region5: #{tpu_custom_call.1} parent=1 // pred_fallthru
      _
    // Predicated region
    $region6: #{tpu_custom_call.1} parent=1 // pred_check
      _
    $region7: #{tpu_custom_call.1} parent=1 // pred_check_branch
      %21 = sbr.rel (0) target = $region9
    $region8: #{tpu_custom_call.1} parent=1 // pred_region
      %s23 = ssub.s32 256, 256
      %24 = vsyncadd [#allocation6], %s23
      %s25 = sshll.u32 [#allocation5], 4
      %s26 = int_to_ptr.vmem [resolvable:$true] %s25
      %31 = dma.hbm_to_vmem [thread:$0]  %s1, 256, %s26, [#allocation6], 128, 128, 8
    $region9: #{tpu_custom_call.1} parent=1 // pred_fallthru
      _
    // Predicated region
    $region10: #{tpu_custom_call.1} parent=1 // pred_check
      _
    $region11: #{tpu_custom_call.1} parent=1 // pred_check_branch
      %33 = sbr.rel (0) target = $region13
    $region12: #{tpu_custom_call.1} parent=1 // pred_region
      %34 = dma.done [#allocation3], 128
    $region13: #{tpu_custom_call.1} parent=1 // pred_fallthru
      _
    // Predicated region
    $region14: #{tpu_custom_call.1} parent=1 // pred_check
      _
    $region15: #{tpu_custom_call.1} parent=1 // pred_check_branch
      %36 = sbr.rel (0) target = $region17
    $region16: #{tpu_custom_call.1} parent=1 // pred_region
      %37 = dma.done [#allocation6], 256
    $region17: #{tpu_custom_call.1} parent=1 // pred_fallthru
      _
    %v38 = vld [vmem:[#allocation2] sm:$0xff]
    %v39 = vld [vmem:[#allocation5] sm:$0xff]
    %v40 = vld [vmem:[#allocation5 + $0x8] sm:$0xff]
    %v42 = vcombine.high %v38, %v38
    %v44 = vunpack.c.l.s4 1966171168
    %v45 = vunpack.c.0.s8 %v44
    %v46 = vlaneseq
    %v47 = vshrl.u32 %v46, 7
    %v48 = vsub.s32 %v45, %v47
    %v49 = vrot.slane %v38, %v48
    %v51 = vunpack.c.l.s4 1966171168
    %v52 = vunpack.c.0.s8 %v51
    %v53 = vlaneseq
    %v54 = vshrl.u32 %v53, 7
    %v55 = vsub.s32 %v52, %v54
    %v56 = vrot.slane %v42, %v55
    %v57 = vcombine.high %v49, %v49
    %v58 = vcombine.high %v56, %v56
    %v60 = vunpack.c.l.s4 1966171168
    %v61 = vunpack.c.0.s8 %v60
    %v62 = vlaneseq
    %v63 = vshrl.u32 %v62, 7
    %v64 = vsub.s32 %v61, %v63
    %v65 = vrot.slane %v49, %v64
    %v67 = vunpack.c.l.s4 1966171168
    %v68 = vunpack.c.0.s8 %v67
    %v69 = vlaneseq
    %v70 = vshrl.u32 %v69, 7
    %v71 = vsub.s32 %v68, %v70
    %v72 = vrot.slane %v56, %v71
    %v74 = vunpack.c.l.s4 1966171168
    %v75 = vunpack.c.0.s8 %v74
    %v76 = vlaneseq
    %v77 = vshrl.u32 %v76, 7
    %v78 = vsub.s32 %v75, %v77
    %v79 = vrot.slane %v57, %v78
    %v81 = vunpack.c.l.s4 1966171168
    %v82 = vunpack.c.0.s8 %v81
    %v83 = vlaneseq
    %v84 = vshrl.u32 %v83, 7
    %v85 = vsub.s32 %v82, %v84
    %v86 = vrot.slane %v58, %v85
    %v87 = vcombine.high %v65, %v65
    %v88 = vcombine.high %v72, %v72
    %v89 = vcombine.high %v79, %v79
    %v90 = vcombine.high %v86, %v86
    %v91 = vlaneseq
    %v92 = vshrl.u32 %v91, 7
    %v93 = vsub.s32 0, %v92
    %v94 = vrot.slane %v65, %v93
    %v95 = vlaneseq
    %v96 = vshrl.u32 %v95, 7
    %v97 = vsub.s32 0, %v96
    %v98 = vrot.slane %v79, %v97
    %v99 = vlaneseq
    %v100 = vshrl.u32 %v99, 7
    %v101 = vsub.s32 0, %v100
    %v102 = vrot.slane %v87, %v101
    %v103 = vlaneseq
    %v104 = vshrl.u32 %v103, 7
    %v105 = vsub.s32 0, %v104
    %v106 = vrot.slane %v89, %v105
    %v107 = vlaneseq
    %v108 = vshrl.u32 %v107, 7
    %v109 = vsub.s32 0, %v108
    %v110 = vrot.slane %v72, %v109
    %v111 = vlaneseq
    %v112 = vshrl.u32 %v111, 7
    %v113 = vsub.s32 0, %v112
    %v114 = vrot.slane %v86, %v113
    %v115 = vlaneseq
    %v116 = vshrl.u32 %v115, 7
    %v117 = vsub.s32 0, %v116
    %v118 = vrot.slane %v88, %v117
    %v119 = vlaneseq
    %v120 = vshrl.u32 %v119, 7
    %v121 = vsub.s32 0, %v120
    %v122 = vrot.slane %v90, %v121
    %v131 = vsub.f32 %v94, %v39
    %v132 = vsub.f32 %v94, %v40
    %v133 = vsub.f32 %v98, %v39
    %v134 = vsub.f32 %v98, %v40
    %v135 = vsub.f32 %v102, %v39
    %v136 = vsub.f32 %v102, %v40
    %v137 = vsub.f32 %v106, %v39
    %v138 = vsub.f32 %v106, %v40
    %v139 = vsub.f32 %v110, %v39
    %v140 = vsub.f32 %v110, %v40
    %v141 = vsub.f32 %v114, %v39
    %v142 = vsub.f32 %v114, %v40
    %v143 = vsub.f32 %v118, %v39
    %v144 = vsub.f32 %v118, %v40
    %v145 = vsub.f32 %v122, %v39
    %v146 = vsub.f32 %v122, %v40
    %147 = vst [vmem:[#allocation7] sm:$0xff] %v131
    %148 = vst [vmem:[#allocation7 + $0x8] sm:$0xff] %v132
    %149 = vst [vmem:[#allocation7 + $0x10] sm:$0xff] %v133
    %150 = vst [vmem:[#allocation7 + $0x18] sm:$0xff] %v134
    %151 = vst [vmem:[#allocation7 + $0x20] sm:$0xff] %v135
    %152 = vst [vmem:[#allocation7 + $0x28] sm:$0xff] %v136
    %153 = vst [vmem:[#allocation7 + $0x30] sm:$0xff] %v137
    %154 = vst [vmem:[#allocation7 + $0x38] sm:$0xff] %v138
    %155 = vst [vmem:[#allocation7 + $0x40] sm:$0xff] %v139
    %156 = vst [vmem:[#allocation7 + $0x48] sm:$0xff] %v140
    %157 = vst [vmem:[#allocation7 + $0x50] sm:$0xff] %v141
    %158 = vst [vmem:[#allocation7 + $0x58] sm:$0xff] %v142
    %159 = vst [vmem:[#allocation7 + $0x60] sm:$0xff] %v143
    %160 = vst [vmem:[#allocation7 + $0x68] sm:$0xff] %v144
    %161 = vst [vmem:[#allocation7 + $0x70] sm:$0xff] %v145
    %162 = vst [vmem:[#allocation7 + $0x78] sm:$0xff] %v146
    // Predicated region
    $region18: #{tpu_custom_call.1} parent=1 // pred_check
      _
    $region19: #{tpu_custom_call.1} parent=1 // pred_check_branch
      %164 = sbr.rel (0) target = $region21
    $region20: #{tpu_custom_call.1} parent=1 // pred_region
      %s166 = ssub.s32 2048, 2048
      %167 = vsyncadd [#allocation4], %s166
      %s168 = sshll.u32 [#allocation7], 4
      %s169 = int_to_ptr.vmem [resolvable:$true] %s168
      %174 = dma.vmem_to_hbm [thread:$0]  %s169, 2048, %s2, [#allocation4], 128, 128, 8
    $region21: #{tpu_custom_call.1} parent=1 // pred_fallthru
      _
    // Predicated region
    $region22: #{tpu_custom_call.1} parent=1 // pred_check
      _
    $region23: #{tpu_custom_call.1} parent=1 // pred_check_branch
      %176 = sbr.rel (0) target = $region25
    $region24: #{tpu_custom_call.1} parent=1 // pred_region
      %177 = dma.done [#allocation4], 2048
    $region25: #{tpu_custom_call.1} parent=1 // pred_fallthru
      _
    %178 = vsyncpa [#allocation3], 1
    %179 = vsyncpa [#allocation6], 1
    %180 = vsyncpa [#allocation4], 1

</llo_original>
